<compile_context>
chip_gen: v6e
topology: v6e:2x2x1
jax: 0.10.0
libtpu: 0.0.40
codegen_flags: <defaults>
</compile_context>

<pallas_src>
import functools

import jax
import jax.numpy as jnp
from jax.experimental import pallas as pl
from jax.experimental.pallas import tpu as pltpu


def mlp_kernel(x_ref, w1_ref, b1_ref, w2_ref, b2_ref, y_ref):
    # x_ref:  (bm, in)    caller dtype (f32 ok) -- cast to bf16 here, in-kernel
    # w1_ref: (in, hid)   bf16, pre-transposed once in prepare_params
    # b1_ref: (1, hid)    f32
    # w2_ref: (hid, out)  bf16, pre-transposed once in prepare_params
    # b2_ref: (1, out)    f32
    # y_ref:  (bm, out)   natural layout -> no wrapper-side transpose
    x = x_ref[...].astype(w1_ref.dtype)              # cast inside kernel: no extra HBM pass

    # h = x @ W1^T  (canonical (m,k)x(k,n) on the MXU, f32 accumulation)
    h = jnp.dot(x, w1_ref[...], preferred_element_type=jnp.float32)
    h = jnp.maximum(h + b1_ref[...], 0.0)            # bias + ReLU on the VPU
    h = h.astype(w2_ref.dtype)                       # back to bf16 for MXU #2

    # y = h @ W2^T  (canonical contraction, natural (bm, out) output)
    y = jnp.dot(h, w2_ref[...], preferred_element_type=jnp.float32)
    y_ref[...] = (y + b2_ref[...]).astype(y_ref.dtype)


def prepare_params(w1, b1, w2, b2, compute_dtype=jnp.bfloat16):
    """One-time parameter prep (layout + dtype), hoisted out of the hot path.

    nn.Linear gives W1: (hid, in), W2: (out, hid); store them transposed so both
    in-kernel matmuls are canonical (lhs last dim contracts rhs first dim).
    """
    return {
        "w1": jnp.asarray(w1).T.astype(compute_dtype),              # (in, hid)
        "b1": jnp.asarray(b1).reshape(1, -1).astype(jnp.float32),   # (1, hid)
        "w2": jnp.asarray(w2).T.astype(compute_dtype),              # (hid, out)
        "b2": jnp.asarray(b2).reshape(1, -1).astype(jnp.float32),   # (1, out)
    }


def _pick_batch_tile(B, block_b):
    """Largest batch tile that amortizes per-grid-step overhead while keeping
    >= 2 grid steps for large batches (v7x megacore). Result is either the full
    batch (tiny B) or a multiple of 128 rows (sublane/DMA friendly)."""
    if B <= min(block_b, 1024):
        return B                                     # single full-extent tile
    half_rounded = 128 * pl.cdiv(pl.cdiv(B, 2), 128)
    return min(block_b, half_rounded)


@functools.partial(jax.jit, static_argnames=("block_b", "out_dtype"))
def job_recommender_mlp(x, params, *, block_b=16384, out_dtype=jnp.float32):
    """x: (B, input_dim); params from prepare_params(). Returns (B, output_dim)."""
    assert block_b % 128 == 0, "block_b must be a multiple of 128"
    B, in_dim = x.shape
    in_dim_w, hid = params["w1"].shape
    hid_w, out_dim = params["w2"].shape
    assert in_dim_w == in_dim and hid_w == hid

    bm = _pick_batch_tile(B, block_b)
    grid = (pl.cdiv(B, bm),)

    w_itemsize = jnp.dtype(params["w1"].dtype).itemsize
    cost = pl.CostEstimate(
        flops=2 * B * (in_dim * hid + hid * out_dim),
        transcendentals=0,
        bytes_accessed=(B * in_dim * jnp.dtype(x.dtype).itemsize          # x (caller dtype)
                        + (in_dim * hid + hid * out_dim) * w_itemsize     # W1, W2
                        + (hid + out_dim) * 4                             # biases (f32)
                        + B * out_dim * jnp.dtype(out_dtype).itemsize),   # y
    )

    y = pl.pallas_call(
        mlp_kernel,
        out_shape=jax.ShapeDtypeStruct((B, out_dim), out_dtype),
        grid_spec=pltpu.PrefetchScalarGridSpec(
            num_scalar_prefetch=0,
            grid=grid,
            in_specs=[
                # x: batch-tiled, double-buffered by default.
                pl.BlockSpec((bm, in_dim), lambda i: (i, 0)),
                # Weights / biases: constant index_map -> VMEM-resident,
                # single-buffered (no redundant double-buffer / DMA descriptors).
                pl.BlockSpec((in_dim, hid), lambda i: (0, 0),
                             pipeline_mode=pl.Buffered(1)),
                pl.BlockSpec((1, hid), lambda i: (0, 0),
                             pipeline_mode=pl.Buffered(1)),
                pl.BlockSpec((hid, out_dim), lambda i: (0, 0),
                             pipeline_mode=pl.Buffered(1)),
                pl.BlockSpec((1, out_dim), lambda i: (0, 0),
                             pipeline_mode=pl.Buffered(1)),
            ],
            # Natural (batch, out_dim) layout: no external transpose pass.
            out_specs=pl.BlockSpec((bm, out_dim), lambda i: (i, 0)),
        ),
        compiler_params=pltpu.CompilerParams(
            dimension_semantics=("parallel",),       # v7x megacore; neutral v5e/v6e
            vmem_limit_bytes=48 * 1024 * 1024,       # headroom under v7x's 64 MiB VMEM
        ),
        cost_estimate=cost,
    )(x, params["w1"], params["b1"], params["w2"], params["b2"])

    return y


if __name__ == "__main__":
    # Shapes implied by the module: input_dim=32, hidden_dim=64, output_dim=16.
    input_dim, hidden_dim, output_dim = 32, 64, 16

    key = jax.random.PRNGKey(0)
    kx, kw1, kb1, kw2, kb2, kx2 = jax.random.split(key, 6)

    # nn.Linear parameter shapes: W (out, in), b (out,)
    w1 = jax.random.normal(kw1, (hidden_dim, input_dim), dtype=jnp.float32) * 0.1
    b1 = jax.random.normal(kb1, (hidden_dim,), dtype=jnp.float32) * 0.1
    w2 = jax.random.normal(kw2, (output_dim, hidden_dim), dtype=jnp.float32) * 0.1
    b2 = jax.random.normal(kb2, (output_dim,), dtype=jnp.float32) * 0.1

    params = prepare_params(w1, b1, w2, b2)   # one-time layout / dtype prep

    def reference(xa):
        # Same bf16 rounding of inputs/weights as the kernel, f32 accumulation.
        xr = xa.astype(jnp.bfloat16).astype(jnp.float32)
        w1r = w1.astype(jnp.bfloat16).astype(jnp.float32)
        w2r = w2.astype(jnp.bfloat16).astype(jnp.float32)
        h = jnp.maximum(xr @ w1r.T + b1, 0.0)
        h = h.astype(jnp.bfloat16).astype(jnp.float32)
        return h @ w2r.T + b2

    # Case 1: small batch -> single full-extent tile.
    x = jax.random.normal(kx, (8, input_dim), dtype=jnp.float32)
    y = job_recommender_mlp(x, params)
    jax.block_until_ready(y)
    assert y.shape == (8, output_dim)
    assert y.dtype == jnp.float32
    assert jnp.allclose(y, reference(x), atol=2e-3, rtol=2e-2), float(
        jnp.max(jnp.abs(y - reference(x))))

    # Case 2: ragged, tiled batch (B % bm != 0) -> exercises the grid path with
    # a padded last read block and a clipped last write block.
    x2 = jax.random.normal(kx2, (200, input_dim), dtype=jnp.float32)
    y2 = job_recommender_mlp(x2, params, block_b=128)   # bm=128, grid=(2,)
    jax.block_until_ready(y2)
    assert y2.shape == (200, output_dim)
    assert jnp.allclose(y2, reference(x2), atol=2e-3, rtol=2e-2), float(
        jnp.max(jnp.abs(y2 - reference(x2))))

    print("KERNEL_OK")
</pallas_src>

<mosaic_0001>
module attributes {stable_mosaic.version = 11 : i64} {
  func.func @mlp_kernel(%arg0: i32, %arg1: memref<8x32xf32, #tpu.memory_space<vmem>>, %arg2: memref<32x64xbf16, #tpu.memory_space<vmem>>, %arg3: memref<1x64xf32, #tpu.memory_space<vmem>>, %arg4: memref<64x16xbf16, #tpu.memory_space<vmem>>, %arg5: memref<1x16xf32, #tpu.memory_space<vmem>>, %arg6: memref<8x16xf32, #tpu.memory_space<vmem>>) attributes {dimension_semantics = [#tpu.dimension_semantics<parallel>], iteration_bounds = array<i64: 1>, scalar_prefetch = 0 : i64, scratch_operands = 0 : i64, tpu.core_type = #tpu.core_type<tc>, window_params = [{transform_indices = @transform_0, window_bounds = array<i64: 8, 32>}, {pipeline_mode = #tpu.pipeline_mode<synchronous>, transform_indices = @transform_1, window_bounds = array<i64: 32, 64>}, {pipeline_mode = #tpu.pipeline_mode<synchronous>, transform_indices = @transform_2, window_bounds = array<i64: 1, 64>}, {pipeline_mode = #tpu.pipeline_mode<synchronous>, transform_indices = @transform_3, window_bounds = array<i64: 64, 16>}, {pipeline_mode = #tpu.pipeline_mode<synchronous>, transform_indices = @transform_4, window_bounds = array<i64: 1, 16>}, {transform_indices = @transform_5, window_bounds = array<i64: 8, 16>}]} {
    %c0 = arith.constant 0 : index
    %c0_0 = arith.constant 0 : index
    %0 = vector.load %arg1[%c0, %c0_0] : memref<8x32xf32, #tpu.memory_space<vmem>>, vector<8x32xf32>
    %1 = arith.truncf %0 : vector<8x32xf32> to vector<8x32xbf16>
    %c0_1 = arith.constant 0 : index
    %c0_2 = arith.constant 0 : index
    %2 = vector.load %arg2[%c0_1, %c0_2] : memref<32x64xbf16, #tpu.memory_space<vmem>>, vector<32x64xbf16>
    %cst = arith.constant dense<0.000000e+00> : vector<8x64xf32>
    %3 = tpu.matmul %1, %2, %cst {dimension_numbers = #tpu.dot_dimension_numbers<[1], [0], [0], [1], [0, 0, 1, 1], [], []>} : vector<8x32xbf16>, vector<32x64xbf16>, vector<8x64xf32> -> vector<8x64xf32>
    %c0_3 = arith.constant 0 : index
    %c0_4 = arith.constant 0 : index
    %4 = vector.load %arg3[%c0_3, %c0_4] : memref<1x64xf32, #tpu.memory_space<vmem>>, vector<1x64xf32>
    %5 = vector.broadcast %4 : vector<1x64xf32> to vector<8x64xf32>
    %6 = arith.addf %3, %5 : vector<8x64xf32>
    %cst_5 = arith.constant 0.000000e+00 : f32
    %7 = vector.broadcast %cst_5 : f32 to vector<8x64xf32>
    %8 = arith.maximumf %6, %7 : vector<8x64xf32>
    %9 = arith.truncf %8 : vector<8x64xf32> to vector<8x64xbf16>
    %c0_6 = arith.constant 0 : index
    %c0_7 = arith.constant 0 : index
    %10 = vector.load %arg4[%c0_6, %c0_7] : memref<64x16xbf16, #tpu.memory_space<vmem>>, vector<64x16xbf16>
    %cst_8 = arith.constant dense<0.000000e+00> : vector<8x16xf32>
    %11 = tpu.matmul %9, %10, %cst_8 {dimension_numbers = #tpu.dot_dimension_numbers<[1], [0], [0], [1], [0, 0, 1, 1], [], []>} : vector<8x64xbf16>, vector<64x16xbf16>, vector<8x16xf32> -> vector<8x16xf32>
    %c0_9 = arith.constant 0 : index
    %c0_10 = arith.constant 0 : index
    %12 = vector.load %arg5[%c0_9, %c0_10] : memref<1x16xf32, #tpu.memory_space<vmem>>, vector<1x16xf32>
    %13 = vector.broadcast %12 : vector<1x16xf32> to vector<8x16xf32>
    %14 = arith.addf %11, %13 : vector<8x16xf32>
    %c0_11 = arith.constant 0 : index
    %c0_12 = arith.constant 0 : index
    %15 = vector.load %arg6[%c0_11, %c0_12] : memref<8x16xf32, #tpu.memory_space<vmem>>, vector<8x16xf32>
    tpu.vector_store %arg6[%c0_11, %c0_12], %14 {strides = array<i32>} : memref<8x16xf32, #tpu.memory_space<vmem>>, vector<8x16xf32>,
    return
  }
  func.func @transform_0(%arg0: i32) -> (i32, i32) {
    %c0_i32 = arith.constant 0 : i32
    %c0_i32_0 = arith.constant 0 : i32
    return %arg0, %c0_i32 : i32, i32
  }
  func.func @transform_1(%arg0: i32) -> (i32, i32) {
    %c0_i32 = arith.constant 0 : i32
    %c0_i32_0 = arith.constant 0 : i32
    %c0_i32_1 = arith.constant 0 : i32
    return %c0_i32, %c0_i32_0 : i32, i32
  }
  func.func @transform_2(%arg0: i32) -> (i32, i32) {
    %c0_i32 = arith.constant 0 : i32
    %c0_i32_0 = arith.constant 0 : i32
    %c0_i32_1 = arith.constant 0 : i32
    return %c0_i32, %c0_i32_0 : i32, i32
  }
  func.func @transform_3(%arg0: i32) -> (i32, i32) {
    %c0_i32 = arith.constant 0 : i32
    %c0_i32_0 = arith.constant 0 : i32
    %c0_i32_1 = arith.constant 0 : i32
    return %c0_i32, %c0_i32_0 : i32, i32
  }
  func.func @transform_4(%arg0: i32) -> (i32, i32) {
    %c0_i32 = arith.constant 0 : i32
    %c0_i32_0 = arith.constant 0 : i32
    %c0_i32_1 = arith.constant 0 : i32
    return %c0_i32, %c0_i32_0 : i32, i32
  }
  func.func @transform_5(%arg0: i32) -> (i32, i32) {
    %c0_i32 = arith.constant 0 : i32
    %c0_i32_0 = arith.constant 0 : i32
    return %arg0, %c0_i32 : i32, i32
  }
}

</mosaic_0001>

<llo_original>
// kernel: job_recommender_mlp.1
$region0: #{job_recommender_mlp.1}
  #allocation0 [shape = 'u32[]', space=smem, size = 0x4, offset = 0x4, fixed_abs, tag = 'smem constant byte address 0x4 - core index']
  #allocation1 [shape = 'u32[144,128]{1,0:T(1,128)}', space=vmem, size = 0x12000, scoped, tag = 'internal scratch']
  %s0 = inlined_call_operand.vmem [shape: f32[8,32], index: 0, kind: input, shape index: {}]
  %s1 = inlined_call_operand.vmem [shape: bf16[32,64], index: 1, kind: input, shape index: {}]
  %s2 = inlined_call_operand.vmem [shape: f32[1,64], index: 2, kind: input, shape index: {}]
  %s3 = inlined_call_operand.vmem [shape: bf16[64,16], index: 3, kind: input, shape index: {}]
  %s4 = inlined_call_operand.vmem [shape: f32[1,16], index: 4, kind: input, shape index: {}]
  %s5 = inlined_call_operand.hbm [shape: f32[8,16], index: 5, kind: output, shape index: {}]
  %s6 = sld [smem:[#allocation0]]
  $region30: #{job_recommender_mlp.1} parent=0
    _
  %s8 = ssub.s32 1, %s6
  %s9 = scalar_select 0, %s8, %s6
  $region1: #{job_recommender_mlp.1} parent=0
    #allocation2 [shape = 'u8[4096]{0}', space=vmem, size = 0x1000, scoped, tag = 'output window, operand 0, single buffered']
    #allocation3 [shape = 's32[1]{0}', space=sflag, size = 0x4, scoped, tag = 'scoped memory for job_recommender_mlp.1']
    %10 = vsyncpa [#allocation3], 0
    // Predicated region
    $region2: #{job_recommender_mlp.1} parent=1 // pred_check
      _
    $region3: #{job_recommender_mlp.1} parent=1 // pred_check_branch
      %12 = sbr.rel (0) target = $region5
    $region4: #{job_recommender_mlp.1} parent=1 // pred_region
      _
    $region5: #{job_recommender_mlp.1} parent=1 // pred_fallthru
      _
    // Predicated region
    $region6: #{job_recommender_mlp.1} parent=1 // pred_check
      _
    $region7: #{job_recommender_mlp.1} parent=1 // pred_check_branch
      %14 = sbr.rel (0) target = $region9
    $region8: #{job_recommender_mlp.1} parent=1 // pred_region
      _
    $region9: #{job_recommender_mlp.1} parent=1 // pred_fallthru
      _
    // Predicated region
    $region10: #{job_recommender_mlp.1} parent=1 // pred_check
      _
    $region11: #{job_recommender_mlp.1} parent=1 // pred_check_branch
      %16 = sbr.rel (0) target = $region13
    $region12: #{job_recommender_mlp.1} parent=1 // pred_region
      _
    $region13: #{job_recommender_mlp.1} parent=1 // pred_fallthru
      _
    // Predicated region
    $region14: #{job_recommender_mlp.1} parent=1 // pred_check
      _
    $region15: #{job_recommender_mlp.1} parent=1 // pred_check_branch
      %18 = sbr.rel (0) target = $region17
    $region16: #{job_recommender_mlp.1} parent=1 // pred_region
      _
    $region17: #{job_recommender_mlp.1} parent=1 // pred_fallthru
      _
    // Predicated region
    $region18: #{job_recommender_mlp.1} parent=1 // pred_check
      _
    $region19: #{job_recommender_mlp.1} parent=1 // pred_check_branch
      %20 = sbr.rel (0) target = $region21
    $region20: #{job_recommender_mlp.1} parent=1 // pred_region
      _
    $region21: #{job_recommender_mlp.1} parent=1 // pred_fallthru
      _
    %v22 = vld [vmem:[%s0] sm:$0xff]
    %v23 = vpack.c.bf16 %v22, %v22
    %v24 = vld [vmem:[%s1] sm:$0xf]
    %v25 = vld [vmem:[%s1 + $0x4] sm:$0xf]
    %v26 = vld [vmem:[%s1 + $0x8] sm:$0xf]
    %v27 = vld [vmem:[%s1 + $0xc] sm:$0xf]
    %v28 = vld [vmem:[%s2] sm:$0x1]
    %v30 = vlaneseq
    %v31 = vshrl.u32 %v30, 7
    %v32 = vsub.s32 0, %v31
    %v33 = vrot.slane %v28, %v32
    %v39 = vunpack.c.l.b16 %v24
    %v40 = vunpack.c.l.b16 %v25
    %v41 = vunpack.c.l.b16 %v26
    %v42 = vunpack.c.l.b16 %v27
    %v43 = vpack.c.b16 %v40, %v39
    %v44 = vpack.c.b16 %v42, %v41
    %vm47 = vcmask 261120
    %v49 = vsel %vm47, %v23, 0
    %51 = vmatprep.subr.bf16.mxu0 0
    %52 = vmatpush1.bf16.msra.mxu0 0
    %53 = vmatprep.subr.bf16.mxu0 0
    %54 = vmatpush1.bf16.msra.mxu0 0
    %55 = vmatprep.subr.bf16.mxu0 0
    %56 = vmatpush1.bf16.msra.mxu0 0
    %57 = vmatprep.subr.bf16.mxu0 0
    %58 = vmatpush1.bf16.msra.mxu0 0
    %59 = vmatprep.subr.bf16.mxu0 0
    %60 = vmatpush1.bf16.msra.mxu0 0
    %61 = vmatprep.subr.bf16.mxu0 0
    %62 = vmatpush1.bf16.msra.mxu0 0
    %63 = vmatprep.subr.bf16.mxu0 0
    %64 = vmatpush1.bf16.msra.mxu0 %v44
    %65 = vmatprep.subr.bf16.mxu0 0
    %66 = vmatpush1.bf16.msra.mxu0 %v43
    %67 = vmatprep.subr.bf16.mxu0 0
    %68 = vmatpush2.bf16.msra.mxu0 0
    %69 = vmatprep.subr.bf16.mxu0 0
    %70 = vmatpush2.bf16.msra.mxu0 0
    %71 = vmatprep.subr.bf16.mxu0 0
    %72 = vmatpush2.bf16.msra.mxu0 0
    %73 = vmatprep.subr.bf16.mxu0 0
    %74 = vmatpush2.bf16.msra.mxu0 0
    %75 = vmatprep.subr.bf16.mxu0 0
    %76 = vmatpush2.bf16.msra.mxu0 0
    %77 = vmatprep.subr.bf16.mxu0 0
    %78 = vmatpush2.bf16.msra.mxu0 0
    %79 = vmatprep.subr.bf16.mxu0 0
    %80 = vmatpush2.bf16.msra.mxu0 0
    %81 = vmatprep.subr.bf16.mxu0 0
    %82 = vmatpush2.bf16.msra.mxu0 0
    %83 = vmatprep.mubr.bf16.mxu0 0
    %84 = vmatmul.mubr.bf16.gmra.mxu0 %v49
    %v85 = vpop.f32.mrf.mxu0
    %v86 = vadd.f32 %v33, %v85
    %v87 = vpop.f32.mrf.mxu0
    %v88 = vpop.f32.mrf.mxu0
    %v89 = vpop.f32.mrf.mxu0
    %90 = vdwg.mxu0
    %v91 = vmax.f32 %v86, 0.0
    %v92 = vpack.c.bf16 %v91, %v91
    %v93 = vld [vmem:[%s3] sm:$0xf]
    %v94 = vld [vmem:[%s3 + $0x4] sm:$0xf]
    %v95 = vld [vmem:[%s3 + $0x8] sm:$0xf]
    %v96 = vld [vmem:[%s3 + $0xc] sm:$0xf]
    %v97 = vld [vmem:[%s3 + $0x10] sm:$0xf]
    %v98 = vld [vmem:[%s3 + $0x14] sm:$0xf]
    %v99 = vld [vmem:[%s3 + $0x18] sm:$0xf]
    %v100 = vld [vmem:[%s3 + $0x1c] sm:$0xf]
    %v101 = vld [vmem:[%s4] sm:$0x1]
    %v103 = vlaneseq
    %v104 = vshrl.u32 %v103, 7
    %v105 = vsub.s32 0, %v104
    %v106 = vrot.slane %v101, %v105
    %v116 = vunpack.c.l.b16 %v93
    %v117 = vunpack.c.l.b16 %v94
    %v118 = vunpack.c.l.b16 %v95
    %v119 = vunpack.c.l.b16 %v96
    %v120 = vunpack.c.l.b16 %v97
    %v121 = vunpack.c.l.b16 %v98
    %v122 = vunpack.c.l.b16 %v99
    %v123 = vunpack.c.l.b16 %v100
    %v124 = vpack.c.b16 %v117, %v116
    %v125 = vpack.c.b16 %v119, %v118
    %v126 = vpack.c.b16 %v121, %v120
    %v127 = vpack.c.b16 %v123, %v122
    %vm132 = vcmask 523264
    %v134 = vsel %vm132, %v92, 0
    %136 = vmatprep.subr.bf16.mxu0 0
    %137 = vmatpush1.bf16.msra.mxu0 0
    %138 = vmatprep.subr.bf16.mxu0 0
    %139 = vmatpush1.bf16.msra.mxu0 0
    %140 = vmatprep.subr.bf16.mxu0 0
    %141 = vmatpush1.bf16.msra.mxu0 0
    %142 = vmatprep.subr.bf16.mxu0 0
    %143 = vmatpush1.bf16.msra.mxu0 0
    %144 = vmatprep.subr.bf16.mxu0 0
    %145 = vmatpush1.bf16.msra.mxu0 %v127
    %146 = vmatprep.subr.bf16.mxu0 0
    %147 = vmatpush1.bf16.msra.mxu0 %v126
    %148 = vmatprep.subr.bf16.mxu0 0
    %149 = vmatpush1.bf16.msra.mxu0 %v125
    %150 = vmatprep.subr.bf16.mxu0 0
    %151 = vmatpush1.bf16.msra.mxu0 %v124
    %152 = vmatprep.subr.bf16.mxu0 0
    %153 = vmatpush2.bf16.msra.mxu0 0
    %154 = vmatprep.subr.bf16.mxu0 0
    %155 = vmatpush2.bf16.msra.mxu0 0
    %156 = vmatprep.subr.bf16.mxu0 0
    %157 = vmatpush2.bf16.msra.mxu0 0
    %158 = vmatprep.subr.bf16.mxu0 0
    %159 = vmatpush2.bf16.msra.mxu0 0
    %160 = vmatprep.subr.bf16.mxu0 0
    %161 = vmatpush2.bf16.msra.mxu0 0
    %162 = vmatprep.subr.bf16.mxu0 0
    %163 = vmatpush2.bf16.msra.mxu0 0
    %164 = vmatprep.subr.bf16.mxu0 0
    %165 = vmatpush2.bf16.msra.mxu0 0
    %166 = vmatprep.subr.bf16.mxu0 0
    %167 = vmatpush2.bf16.msra.mxu0 0
    %168 = vmatprep.mubr.bf16.mxu0 0
    %169 = vmatmul.mubr.bf16.gmra.mxu0 %v134
    %v170 = vpop.f32.mrf.mxu0
    %v171 = vadd.f32 %v106, %v170
    %v172 = vpop.f32.mrf.mxu0
    %v173 = vpop.f32.mrf.mxu0
    %v174 = vpop.f32.mrf.mxu0
    %175 = vdwg.mxu0
    %vm176 = vcmask 130048
    %177 = vst.msk [vmem:[#allocation2] sm:$0xff] %vm176, %v171
    // Predicated region
    $region22: #{job_recommender_mlp.1} parent=1 // pred_check
      _
    $region23: #{job_recommender_mlp.1} parent=1 // pred_check_branch
      %179 = sbr.rel (0) target = $region25
    $region24: #{job_recommender_mlp.1} parent=1 // pred_region
      %s181 = ssub.s32 128, 128
      %182 = vsyncadd [#allocation3], %s181
      %s184 = sshll.u32 [#allocation2], 4
      %s185 = int_to_ptr.vmem [resolvable:$true] %s184
      %187 = dma.vmem_to_hbm [thread:$0]  %s185, 128, %s5, [#allocation3]
    $region25: #{job_recommender_mlp.1} parent=1 // pred_fallthru
      _
    // Predicated region
    $region26: #{job_recommender_mlp.1} parent=1 // pred_check
      _
    $region27: #{job_recommender_mlp.1} parent=1 // pred_check_branch
      %189 = sbr.rel (0) target = $region29
    $region28: #{job_recommender_mlp.1} parent=1 // pred_region
      %190 = dma.done [#allocation3], 128
    $region29: #{job_recommender_mlp.1} parent=1 // pred_fallthru
      _
    %191 = vsyncpa [#allocation3], 1

</llo_original>
